<compile_context>
chip_gen: v6e
topology: v6e:2x2x1
jax: 0.10.0
libtpu: 0.0.40
codegen_flags: <defaults>
</compile_context>

<pallas_src>
import jax
import jax.numpy as jnp
from jax.experimental import pallas as pl
from jax.experimental.pallas import tpu as pltpu


_LANES = 128


def _sublanes_for(dtype) -> int:
    """Dense sublane packing: 4-byte -> 8, 2-byte -> 16, 1-byte -> 32."""
    itemsize = jnp.dtype(dtype).itemsize
    return {1: 32, 2: 16}.get(itemsize, 8)


def _tpu_core_info():
    """Best-effort (tensorcores_per_chip, per-core VMEM bytes) with safe fallback."""
    cores, vmem = 1, 128 * 1024 * 1024
    try:
        info = pltpu.get_tpu_info()
        vmem = int(getattr(info, "vmem_capacity_bytes", vmem))
        for name in ("num_cores", "core_count", "tensorcore_count",
                     "num_tensorcores"):
            v = getattr(info, name, None)
            if v:
                cores = int(v)
                break
        else:
            # Heuristic: 64 MiB/TC chips (v7x) have 2 TensorCores per chip;
            # v5e/v6e (128 MiB VMEM) have one.
            cores = 2 if vmem <= 64 * 1024 * 1024 else 1
    except Exception:
        pass
    return cores, vmem


def _hamming_kernel(p_ref, g_ref, out_ref):
    """err = p + g - 2*p*g over a (gblk, S, 128) native-dtype tile, summed over
    the leading axis into the shard's resident (1, S, 128) f32 accumulator."""
    k = pl.program_id(1)

    @pl.when(k == 0)
    def _init():
        out_ref[...] = jnp.zeros_like(out_ref)

    # Cast right after the (narrow, lane-dense) load; all arithmetic and the
    # accumulation stay in f32 on every chip generation.
    p = p_ref[...].astype(jnp.float32)
    g = g_ref[...].astype(jnp.float32)
    # p*(1-g) + (1-p)*g == p + g - 2*p*g
    err = p + g - 2.0 * p * g
    # Reduce only the leading (non-minor) axis: pure cross-vreg VPU adds.
    out_ref[...] = out_ref[...] + jnp.sum(err, axis=0, keepdims=True)


def hamming_loss(pred_perm: jax.Array, gt_perm: jax.Array, *,
                 max_block_groups: int | None = None,
                 num_shards: int | None = None) -> jax.Array:
    """Pallas TPU implementation of HammingLoss.forward:
        errors = X*(1-Xgt) + (1-X)*Xgt ;  loss = errors.mean(0).sum()
    """
    assert pred_perm.shape == gt_perm.shape
    b = pred_perm.shape[0]

    # ---- dtype policy: keep the narrow native dtype end-to-end; cast to f32
    # only inside the kernel (halves/quarters HBM traffic for bf16/int8).
    common = jnp.promote_types(pred_perm.dtype, gt_perm.dtype)
    if common == jnp.bool_:
        common = jnp.dtype(jnp.int8)
    elif jnp.dtype(common).itemsize > 4:
        common = jnp.dtype(jnp.float32)
    p = pred_perm.astype(common).reshape(-1)   # no-op when already `common`
    g = gt_perm.astype(common).reshape(-1)
    total = p.size

    sublanes = _sublanes_for(common)
    group_elems = sublanes * _LANES                          # one packed vreg
    group_bytes = group_elems * jnp.dtype(common).itemsize   # always 4 KiB

    # ---- chip-aware tiling defaults ---------------------------------------
    cores, vmem_cap = _tpu_core_info()
    small_vmem = vmem_cap <= 64 * 1024 * 1024   # v7x-like: 64 MiB / TensorCore
    if max_block_groups is None:
        max_block_groups = 1024 if small_vmem else 2048
    max_block_groups = max(1, min(int(max_block_groups), 2048))
    if num_shards is None:
        num_shards = 2 if (small_vmem or cores >= 2) else 1

    n_groups = pl.cdiv(total, group_elems)
    num_shards = max(1, min(int(num_shards), n_groups))

    # Balanced plan: slack < num_shards*steps groups (plus < 1 group of
    # element padding), instead of up to ~2*gblk groups of pure-zero DMA.
    per_shard = pl.cdiv(n_groups, num_shards)
    steps = pl.cdiv(per_shard, max_block_groups)
    gblk = pl.cdiv(per_shard, steps)
    groups_padded = num_shards * steps * gblk

    pad = groups_padded * group_elems - total
    if pad:
        # Zero padding is inert: err(0, 0) == 0.  allow_input_fusion (below)
        # lets XLA fuse this pad + the reshape into the Pallas operand read.
        p = jnp.pad(p, (0, pad))
        g = jnp.pad(g, (0, pad))
    p3 = p.reshape(groups_padded, sublanes, _LANES)
    g3 = g.reshape(groups_padded, sublanes, _LANES)

    in_spec = pl.BlockSpec((gblk, sublanes, _LANES),
                           lambda s, k: (s * steps + k, 0, 0))
    out_spec = pl.BlockSpec((1, sublanes, _LANES),
                            lambda s, k: (s, 0, 0))   # resident accumulator

    tile_bytes = gblk * group_bytes                   # per input, per buffer
    vmem_limit = min(4 * tile_bytes + (8 << 20),      # 2 inputs x 2 buffers
                     (40 if small_vmem else 48) << 20)

    cost = pl.CostEstimate(
        flops=6 * groups_padded * group_elems,
        transcendentals=0,
        bytes_accessed=2 * groups_padded * group_bytes
                       + num_shards * sublanes * _LANES * 4)

    partials = pl.pallas_call(
        _hamming_kernel,
        out_shape=jax.ShapeDtypeStruct((num_shards, sublanes, _LANES),
                                       jnp.float32),
        grid_spec=pltpu.PrefetchScalarGridSpec(
            num_scalar_prefetch=0,
            grid=(num_shards, steps),
            in_specs=[in_spec, in_spec],
            out_specs=out_spec,
        ),
        compiler_params=pltpu.CompilerParams(
            dimension_semantics=("parallel", "arbitrary"),
            vmem_limit_bytes=int(vmem_limit),
            allow_input_fusion=[True, True],
        ),
        cost_estimate=cost,
    )(p3, g3)

    # mean over batch then sum over (n1, n2) == total_sum / b  (tiny XLA op)
    return jnp.sum(partials) / jnp.float32(b)


def _reference(pred_perm, gt_perm):
    pred_perm = pred_perm.astype(jnp.float32)
    gt_perm = gt_perm.astype(jnp.float32)
    errors = pred_perm * (1.0 - gt_perm) + (1.0 - pred_perm) * gt_perm
    return errors.mean(axis=0).sum()


if __name__ == "__main__":
    key = jax.random.PRNGKey(0)
    k1, k2, k3, k4 = jax.random.split(key, 4)

    # --- test 1: hard permutation matrices, (2, 16, 16), f32 ---------------
    b, n1, n2 = 2, 16, 16
    pred_idx = jax.random.permutation(k1, jnp.tile(jnp.arange(n2), (b, 1)), axis=1)
    gt_idx = jax.random.permutation(k2, jnp.tile(jnp.arange(n2), (b, 1)), axis=1)
    pred_perm = jax.nn.one_hot(pred_idx[:, :n1], n2, dtype=jnp.float32)
    gt_perm = jax.nn.one_hot(gt_idx[:, :n1], n2, dtype=jnp.float32)

    loss1 = hamming_loss(pred_perm, gt_perm)
    jax.block_until_ready(loss1)
    ref1 = _reference(pred_perm, gt_perm)
    assert jnp.allclose(loss1, ref1, rtol=1e-5, atol=1e-5), (loss1, ref1)

    # --- test 2: soft f32 matrices with ragged (non-128-multiple) sizes ----
    soft_pred = jax.random.uniform(k3, (4, 40, 56), dtype=jnp.float32)
    soft_gt = jax.random.uniform(k4, (4, 40, 56), dtype=jnp.float32)
    loss2 = hamming_loss(soft_pred, soft_gt)
    jax.block_until_ready(loss2)
    ref2 = _reference(soft_pred, soft_gt)
    assert jnp.allclose(loss2, ref2, rtol=1e-5, atol=1e-5), (loss2, ref2)

    # --- test 3: force the multi-step / 2-shard grid path on the same data -
    loss3 = hamming_loss(soft_pred, soft_gt, max_block_groups=2, num_shards=2)
    jax.block_until_ready(loss3)
    assert jnp.allclose(loss3, ref2, rtol=1e-5, atol=1e-5), (loss3, ref2)

    # --- test 4: bf16 inputs exercise the packed (G, 16, 128) layout -------
    loss4 = hamming_loss(soft_pred.astype(jnp.bfloat16),
                         soft_gt.astype(jnp.bfloat16))
    jax.block_until_ready(loss4)
    ref4 = _reference(soft_pred.astype(jnp.bfloat16),
                      soft_gt.astype(jnp.bfloat16))
    assert jnp.allclose(loss4, ref4, rtol=1e-3, atol=1e-3), (loss4, ref4)

    # --- test 5: int8 one-hot inputs exercise the packed (G, 32, 128) layout
    loss5 = hamming_loss(pred_perm.astype(jnp.int8), gt_perm.astype(jnp.int8))
    jax.block_until_ready(loss5)
    assert jnp.allclose(loss5, ref1, rtol=1e-5, atol=1e-5), (loss5, ref1)

    print("KERNEL_OK")
</pallas_src>

<mosaic_0001>
module attributes {stable_mosaic.version = 11 : i64} {
  func.func @_hamming_kernel(%arg0: i32, %arg1: i32, %arg2: memref<1x8x128xf32, #tpu.memory_space<vmem>>, %arg3: memref<1x8x128xf32, #tpu.memory_space<vmem>>, %arg4: memref<1x8x128xf32, #tpu.memory_space<vmem>>) attributes {dimension_semantics = [#tpu.dimension_semantics<parallel>, #tpu.dimension_semantics<arbitrary>], iteration_bounds = array<i64: 1, 1>, scalar_prefetch = 0 : i64, scratch_operands = 0 : i64, tpu.core_type = #tpu.core_type<tc>, window_params = [{transform_indices = @transform_0, window_bounds = array<i64: 1, 8, 128>}, {transform_indices = @transform_1, window_bounds = array<i64: 1, 8, 128>}, {transform_indices = @transform_2, window_bounds = array<i64: 1, 8, 128>}]} {
    %c0_i32 = arith.constant 0 : i32
    %0 = arith.cmpi eq, %arg1, %c0_i32 : i32
    %1 = arith.extui %0 : i1 to i32
    %c0_i32_0 = arith.constant 0 : i32
    %2 = arith.cmpi ne, %1, %c0_i32_0 : i32
    scf.if %2 {
      %cst_13 = arith.constant 0.000000e+00 : f32
      %15 = vector.broadcast %cst_13 : f32 to vector<1x8x128xf32>
      %c0_14 = arith.constant 0 : index
      %c0_15 = arith.constant 0 : index
      %c0_16 = arith.constant 0 : index
      %16 = vector.load %arg4[%c0_14, %c0_15, %c0_16] : memref<1x8x128xf32, #tpu.memory_space<vmem>>, vector<1x8x128xf32>
      tpu.vector_store %arg4[%c0_14, %c0_15, %c0_16], %15 {strides = array<i32>} : memref<1x8x128xf32, #tpu.memory_space<vmem>>, vector<1x8x128xf32>,
    } else {
    }
    %c0 = arith.constant 0 : index
    %c0_1 = arith.constant 0 : index
    %c0_2 = arith.constant 0 : index
    %3 = vector.load %arg2[%c0, %c0_1, %c0_2] : memref<1x8x128xf32, #tpu.memory_space<vmem>>, vector<1x8x128xf32>
    %c0_3 = arith.constant 0 : index
    %c0_4 = arith.constant 0 : index
    %c0_5 = arith.constant 0 : index
    %4 = vector.load %arg3[%c0_3, %c0_4, %c0_5] : memref<1x8x128xf32, #tpu.memory_space<vmem>>, vector<1x8x128xf32>
    %5 = arith.addf %3, %4 : vector<1x8x128xf32>
    %cst = arith.constant 2.000000e+00 : f32
    %6 = vector.broadcast %cst : f32 to vector<1x8x128xf32>
    %7 = arith.mulf %6, %3 : vector<1x8x128xf32>
    %8 = arith.mulf %7, %4 : vector<1x8x128xf32>
    %9 = arith.subf %5, %8 : vector<1x8x128xf32>
    %c0_6 = arith.constant 0 : index
    %c0_7 = arith.constant 0 : index
    %c0_8 = arith.constant 0 : index
    %10 = vector.load %arg4[%c0_6, %c0_7, %c0_8] : memref<1x8x128xf32, #tpu.memory_space<vmem>>, vector<1x8x128xf32>
    %cst_9 = arith.constant dense<0.000000e+00> : vector<8x128xf32>
    %11 = vector.multi_reduction <add>, %9, %cst_9 [0] : vector<1x8x128xf32> to vector<8x128xf32>
    %12 = vector.shape_cast %11 : vector<8x128xf32> to vector<1x8x128xf32>
    %13 = arith.addf %10, %12 : vector<1x8x128xf32>
    %c0_10 = arith.constant 0 : index
    %c0_11 = arith.constant 0 : index
    %c0_12 = arith.constant 0 : index
    %14 = vector.load %arg4[%c0_10, %c0_11, %c0_12] : memref<1x8x128xf32, #tpu.memory_space<vmem>>, vector<1x8x128xf32>
    tpu.vector_store %arg4[%c0_10, %c0_11, %c0_12], %13 {strides = array<i32>} : memref<1x8x128xf32, #tpu.memory_space<vmem>>, vector<1x8x128xf32>,
    return
  }
  func.func @transform_0(%arg0: i32, %arg1: i32) -> (i32, i32, i32) {
    %c1_i32 = arith.constant 1 : i32
    %0 = arith.muli %arg0, %c1_i32 : i32
    %1 = arith.addi %0, %arg1 : i32
    %c0_i32 = arith.constant 0 : i32
    %c0_i32_0 = arith.constant 0 : i32
    %c0_i32_1 = arith.constant 0 : i32
    return %1, %c0_i32, %c0_i32_0 : i32, i32, i32
  }
  func.func @transform_1(%arg0: i32, %arg1: i32) -> (i32, i32, i32) {
    %c1_i32 = arith.constant 1 : i32
    %0 = arith.muli %arg0, %c1_i32 : i32
    %1 = arith.addi %0, %arg1 : i32
    %c0_i32 = arith.constant 0 : i32
    %c0_i32_0 = arith.constant 0 : i32
    %c0_i32_1 = arith.constant 0 : i32
    return %1, %c0_i32, %c0_i32_0 : i32, i32, i32
  }
  func.func @transform_2(%arg0: i32, %arg1: i32) -> (i32, i32, i32) {
    %c0_i32 = arith.constant 0 : i32
    %c0_i32_0 = arith.constant 0 : i32
    %c0_i32_1 = arith.constant 0 : i32
    return %arg0, %c0_i32, %c0_i32_0 : i32, i32, i32
  }
}

</mosaic_0001>

<llo_original>
// kernel: tpu_custom_call.1
$region0: #{tpu_custom_call.1}
  #allocation0 [shape = 'u32[]', space=smem, size = 0x4, offset = 0x4, fixed_abs, tag = 'smem constant byte address 0x4 - core index']
  #allocation1 [shape = 'u32[144,128]{1,0:T(1,128)}', space=vmem, size = 0x12000, scoped, tag = 'internal scratch']
  %s0 = inlined_call_operand.hbm [shape: f32[1,8,128], index: 0, kind: input, shape index: {}]
  %s1 = inlined_call_operand.hbm [shape: f32[1,8,128], index: 1, kind: input, shape index: {}]
  %s2 = inlined_call_operand.hbm [shape: f32[1,8,128], index: 2, kind: output, shape index: {}]
  %s3 = sld [smem:[#allocation0]]
  $region30: #{tpu_custom_call.1} parent=0
    _
  %s5 = ssub.s32 1, %s3
  %s6 = scalar_select 0, %s5, %s3
  $region1: #{tpu_custom_call.1} parent=0
    #allocation2 [shape = 'u8[4096]{0}', space=vmem, size = 0x1000, scoped, tag = 'input window, operand 0, single buffered']
    #allocation3 [shape = 's32[1]{0}', space=sflag, size = 0x4, scoped, tag = 'scoped memory for tpu_custom_call.1']
    #allocation4 [shape = 's32[1]{0}', space=sflag, size = 0x4, scoped, tag = 'scoped memory for tpu_custom_call.1']
    #allocation5 [shape = 'u8[4096]{0}', space=vmem, size = 0x1000, scoped, tag = 'input window, operand 1, single buffered']
    #allocation6 [shape = 's32[1]{0}', space=sflag, size = 0x4, scoped, tag = 'scoped memory for tpu_custom_call.1']
    #allocation7 [shape = 'u8[4096]{0}', space=vmem, size = 0x1000, scoped, tag = 'output window, operand 0, single buffered']
    %7 = vsyncpa [#allocation3], 0
    %8 = vsyncpa [#allocation6], 0
    %9 = vsyncpa [#allocation4], 0
    // Predicated region
    $region2: #{tpu_custom_call.1} parent=1 // pred_check
      _
    $region3: #{tpu_custom_call.1} parent=1 // pred_check_branch
      %11 = sbr.rel (0) target = $region5
    $region4: #{tpu_custom_call.1} parent=1 // pred_region
      %s12 = sadd.s32 0, 0
      %s14 = ssub.s32 128, 128
      %15 = vsyncadd [#allocation3], %s14
      %s16 = smul.addr %s12, 128
      %s17 = scalar_lea.hbm %s0, %s16
      %s19 = sshll.u32 [#allocation2], 4
      %s20 = int_to_ptr.vmem [resolvable:$true] %s19
      %22 = dma.hbm_to_vmem [thread:$0]  %s17, 128, %s20, [#allocation3]
    $region5: #{tpu_custom_call.1} parent=1 // pred_fallthru
      _
    // Predicated region
    $region6: #{tpu_custom_call.1} parent=1 // pred_check
      _
    $region7: #{tpu_custom_call.1} parent=1 // pred_check_branch
      %24 = sbr.rel (0) target = $region9
    $region8: #{tpu_custom_call.1} parent=1 // pred_region
      %s25 = sadd.s32 0, 0
      %s27 = ssub.s32 128, 128
      %28 = vsyncadd [#allocation6], %s27
      %s29 = smul.addr %s25, 128
      %s30 = scalar_lea.hbm %s1, %s29
      %s32 = sshll.u32 [#allocation5], 4
      %s33 = int_to_ptr.vmem [resolvable:$true] %s32
      %35 = dma.hbm_to_vmem [thread:$0]  %s30, 128, %s33, [#allocation6]
    $region9: #{tpu_custom_call.1} parent=1 // pred_fallthru
      _
    // Predicated region
    $region10: #{tpu_custom_call.1} parent=1 // pred_check
      _
    $region11: #{tpu_custom_call.1} parent=1 // pred_check_branch
      %37 = sbr.rel (0) target = $region13
    $region12: #{tpu_custom_call.1} parent=1 // pred_region
      %38 = dma.done [#allocation3], 128
    $region13: #{tpu_custom_call.1} parent=1 // pred_fallthru
      _
    // Predicated region
    $region14: #{tpu_custom_call.1} parent=1 // pred_check
      _
    $region15: #{tpu_custom_call.1} parent=1 // pred_check_branch
      %40 = sbr.rel (0) target = $region17
    $region16: #{tpu_custom_call.1} parent=1 // pred_region
      %41 = dma.done [#allocation6], 128
    $region17: #{tpu_custom_call.1} parent=1 // pred_fallthru
      _
    %s42 = sadd.s32 0, 0
    %s43 = sadd.s32 0, 0
    %p44 = scmp.eq.s32.totalorder 0, 0
    // Predicated region
    $region18: #{tpu_custom_call.1} parent=1 // pred_check
      %p45 = pneg %p44
    $region19: #{tpu_custom_call.1} parent=1 // pred_check_branch
      %47 = sbr.rel (%p45) target = $region21
    $region20: #{tpu_custom_call.1} parent=1 // pred_region
      %48 = vst [vmem:[#allocation7] sm:$0xff] 0.0
    $region21: #{tpu_custom_call.1} parent=1 // pred_fallthru
      _
    %v49 = vld [vmem:[#allocation2] sm:$0xff]
    %v50 = vld [vmem:[#allocation5] sm:$0xff]
    %v51 = vadd.f32 %v49, %v50
    %v52 = vmul.f32 %v49, 2.0
    %v53 = vmul.f32 %v52, %v50
    %v54 = vsub.f32 %v51, %v53
    %v55 = vld [vmem:[#allocation7] sm:$0xff]
    %v56 = vadd.f32 %v54, 0.0
    %v57 = vadd.f32 %v55, %v56
    %58 = vst [vmem:[#allocation7] sm:$0xff] %v57
    // Predicated region
    $region22: #{tpu_custom_call.1} parent=1 // pred_check
      _
    $region23: #{tpu_custom_call.1} parent=1 // pred_check_branch
      %60 = sbr.rel (0) target = $region25
    $region24: #{tpu_custom_call.1} parent=1 // pred_region
      %s62 = ssub.s32 128, 128
      %63 = vsyncadd [#allocation4], %s62
      %s65 = sshll.u32 [#allocation7], 4
      %s66 = int_to_ptr.vmem [resolvable:$true] %s65
      %68 = dma.vmem_to_hbm [thread:$0]  %s66, 128, %s2, [#allocation4]
    $region25: #{tpu_custom_call.1} parent=1 // pred_fallthru
      _
    // Predicated region
    $region26: #{tpu_custom_call.1} parent=1 // pred_check
      _
    $region27: #{tpu_custom_call.1} parent=1 // pred_check_branch
      %70 = sbr.rel (0) target = $region29
    $region28: #{tpu_custom_call.1} parent=1 // pred_region
      %71 = dma.done [#allocation4], 128
    $region29: #{tpu_custom_call.1} parent=1 // pred_fallthru
      _
    %72 = vsyncpa [#allocation3], 1
    %73 = vsyncpa [#allocation6], 1
    %74 = vsyncpa [#allocation4], 1

</llo_original>
